<compile_context>
chip_gen: v6e
topology: v6e:2x2x1
jax: 0.10.0
libtpu: 0.0.40
codegen_flags: <defaults>
</compile_context>

<pallas_src>
import functools

import jax
import jax.numpy as jnp
from jax import lax
from jax.experimental import pallas as pl
from jax.experimental.pallas import tpu as pltpu


def _round_up(v, m):
    return (v + m - 1) // m * m


def _lora_linear_kernel(scaling, x_ref, w_ref, bias_ref, a_ref, lb_ref,
                        o_ref, acc_ref, xa_ref):
    """One (i, j, k) grid step of the fused LoRA-Linear forward.

    x_ref    : (tm, tk)       input tile
    w_ref    : (tn, tk)       base weight tile, torch (out, in) layout
    bias_ref : (1,  tn)       base bias tile (f32)
    a_ref    : (tk, Rp)       lora_A tile (rank padded to lane width)
    lb_ref   : (Rp, tn)       lora_B tile
    o_ref    : (tm, tn)       output tile
    acc_ref  : (tm, tn) f32   base-matmul accumulator (VMEM scratch)
    xa_ref   : (tm, Rp) f32   x @ A accumulator       (VMEM scratch)
    """
    k = pl.program_id(2)

    @pl.when(k == 0)
    def _init():
        acc_ref[...] = jnp.zeros_like(acc_ref)
        xa_ref[...] = jnp.zeros_like(xa_ref)

    x = x_ref[...]

    # Base path: contract last dims of x (tm, tk) and W (tn, tk)  ==  x @ W^T,
    # without materializing a transposed weight in HBM.
    acc_ref[...] += lax.dot_general(
        x, w_ref[...],
        dimension_numbers=(((1,), (1,)), ((), ())),
        preferred_element_type=jnp.float32)

    # LoRA path stage 1: xa = x @ A (tiny rank; f32 accumulation).
    xa_ref[...] += jnp.dot(x, a_ref[...], preferred_element_type=jnp.float32)

    @pl.when(k == pl.num_programs(2) - 1)
    def _finalize():
        # Scale the (tm, Rp) intermediate (cheaper than scaling (tm, tn)).
        xa = (scaling * xa_ref[...]).astype(lb_ref.dtype)
        lora = jnp.dot(xa, lb_ref[...], preferred_element_type=jnp.float32)
        o_ref[...] = (acc_ref[...] + bias_ref[...] + lora).astype(o_ref.dtype)


def lora_linear_forward(x, weight, bias, lora_A, lora_B, *, alpha, rank,
                        tm=256, tn=512, tk=512, compute_dtype=None):
    """Fused LoRA + Linear forward.

    x       : (M, K)      activations
    weight  : (N, K)      base nn.Linear weight (torch layout, NOT transposed)
    bias    : (N,)        base bias
    lora_A  : (K, R)      low-rank A
    lora_B  : (R, N)      low-rank B
    """
    M, K = x.shape
    N, K_w = weight.shape
    assert K_w == K, "weight must be (out_features, in_features)"
    R = lora_A.shape[1]
    scaling = float(alpha) / float(rank)

    if compute_dtype is not None:
        x = x.astype(compute_dtype)
        weight = weight.astype(compute_dtype)
        lora_A = lora_A.astype(compute_dtype)
        lora_B = lora_B.astype(compute_dtype)
    out_dtype = x.dtype

    # Clamp tiles to hardware-aligned problem sizes, then pad every array so
    # each grid axis divides evenly and the output tile is lane-dense.
    tm = min(tm, _round_up(M, 8))
    tn = min(tn, _round_up(N, 128))
    tk = min(tk, _round_up(K, 128))
    Mp = _round_up(M, tm)
    Np = _round_up(N, tn)
    Kp = _round_up(K, tk)
    Rp = _round_up(R, 128)   # lane-dense low-rank dimension

    def pad2(a, rows, cols):
        pr, pc = rows - a.shape[0], cols - a.shape[1]
        if pr or pc:
            a = jnp.pad(a, ((0, pr), (0, pc)))
        return a

    # NOTE: padding of the static params (weight/bias/lora_A/lora_B) would be
    # done once at parameter-load time in a real deployment, not per call.
    xp = pad2(x, Mp, Kp)
    wp = pad2(weight, Np, Kp)                               # keep (N, K) layout
    bp = pad2(bias.reshape(1, N).astype(jnp.float32), 1, Np)
    ap = pad2(lora_A, Kp, Rp)
    lbp = pad2(lora_B, Rp, Np)

    grid = (Mp // tm, Np // tn, Kp // tk)

    flops = 2 * M * K * N + 2 * M * K * R + 2 * M * R * N
    bytes_accessed = (xp.size * xp.dtype.itemsize
                      + wp.size * wp.dtype.itemsize
                      + bp.size * bp.dtype.itemsize
                      + ap.size * ap.dtype.itemsize
                      + lbp.size * lbp.dtype.itemsize
                      + Mp * Np * jnp.dtype(out_dtype).itemsize)

    kernel = functools.partial(_lora_linear_kernel, scaling)

    out_padded = pl.pallas_call(
        kernel,
        out_shape=jax.ShapeDtypeStruct((Mp, Np), out_dtype),
        grid_spec=pltpu.PrefetchScalarGridSpec(
            num_scalar_prefetch=0,
            grid=grid,
            in_specs=[
                pl.BlockSpec((tm, tk), lambda i, j, k: (i, k)),   # x
                pl.BlockSpec((tn, tk), lambda i, j, k: (j, k)),   # weight (N,K)
                pl.BlockSpec((1, tn), lambda i, j, k: (0, j)),    # bias
                pl.BlockSpec((tk, Rp), lambda i, j, k: (k, 0)),   # lora_A
                pl.BlockSpec((Rp, tn), lambda i, j, k: (0, j)),   # lora_B
            ],
            out_specs=pl.BlockSpec((tm, tn), lambda i, j, k: (i, j)),
            scratch_shapes=[
                pltpu.VMEM((tm, tn), jnp.float32),   # base accumulator
                pltpu.VMEM((tm, Rp), jnp.float32),   # x @ A accumulator
            ]),
        compiler_params=pltpu.CompilerParams(
            dimension_semantics=("parallel", "parallel", "arbitrary")),
        cost_estimate=pl.CostEstimate(
            flops=flops, transcendentals=0, bytes_accessed=bytes_accessed),
    )(xp, wp, bp, ap, lbp)

    return out_padded[:M, :N]


def _reference(x, weight, bias, lora_A, lora_B, alpha, rank):
    """Pure-JAX eval-mode LoraLayer forward (full-precision matmuls)."""
    hp = lax.Precision.HIGHEST
    scaling = alpha / rank
    base = jnp.dot(x, weight.T, precision=hp) + bias
    lora = jnp.dot(jnp.dot(x, lora_A, precision=hp), lora_B, precision=hp)
    return base + scaling * lora


def _make_inputs(key, M, K, N, R):
    k_x, k_w, k_b, k_a, k_lb = jax.random.split(key, 5)
    x = jax.random.normal(k_x, (M, K), dtype=jnp.float32)
    weight = 0.1 * jax.random.normal(k_w, (N, K), dtype=jnp.float32)
    bias = 0.1 * jax.random.normal(k_b, (N,), dtype=jnp.float32)
    # lora_A ~ N(0, 0.02) per reset_parameters; lora_B small random (instead of
    # zeros) so the low-rank path is non-trivially exercised.
    lora_A = 0.02 * jax.random.normal(k_a, (K, R), dtype=jnp.float32)
    lora_B = 0.02 * jax.random.normal(k_lb, (R, N), dtype=jnp.float32)
    return x, weight, bias, lora_A, lora_B


if __name__ == "__main__":
    key = jax.random.PRNGKey(0)
    k1, k2 = jax.random.split(key)

    # --- Test 1: small shapes matching LoraLayer(nn.Linear(32, 32), rank=4) ---
    M, K, N, R, alpha = 8, 32, 32, 4, 8
    x, w, b, la, lb = _make_inputs(k1, M, K, N, R)
    out = lora_linear_forward(x, w, b, la, lb, alpha=alpha, rank=R)
    out = jax.block_until_ready(out)
    ref = _reference(x, w, b, la, lb, alpha, R)
    assert out.shape == (M, N)
    assert jnp.allclose(out, ref, atol=1e-4, rtol=1e-4), "test1 mismatch"

    # --- Test 2: non-aligned shapes, multi-tile grid (exercises padding,
    #     K-accumulation, and multiple i/j output tiles) ---
    M2, K2, N2, R2, alpha2 = 10, 200, 160, 8, 16
    x2, w2, b2, la2, lb2 = _make_inputs(k2, M2, K2, N2, R2)
    out2 = lora_linear_forward(x2, w2, b2, la2, lb2, alpha=alpha2, rank=R2,
                               tm=8, tn=128, tk=128)
    out2 = jax.block_until_ready(out2)
    ref2 = _reference(x2, w2, b2, la2, lb2, alpha2, R2)
    assert out2.shape == (M2, N2)
    assert jnp.allclose(out2, ref2, atol=1e-4, rtol=1e-4), "test2 mismatch"

    # --- Test 3: bf16 compute dtype (perf config), f32 accumulation ---
    out3 = lora_linear_forward(x2, w2, b2, la2, lb2, alpha=alpha2, rank=R2,
                               tm=8, tn=128, tk=128,
                               compute_dtype=jnp.bfloat16)
    out3 = jax.block_until_ready(out3)
    assert jnp.allclose(out3.astype(jnp.float32), ref2, atol=5e-2, rtol=5e-2), \
        "test3 (bf16) mismatch"

    print("KERNEL_OK")
</pallas_src>

<mosaic_0001>
module attributes {stable_mosaic.version = 11 : i64} {
  func.func @_lora_linear_kernel(%arg0: i32, %arg1: i32, %arg2: i32, %arg3: memref<8x128xf32, #tpu.memory_space<vmem>>, %arg4: memref<128x128xf32, #tpu.memory_space<vmem>>, %arg5: memref<1x128xf32, #tpu.memory_space<vmem>>, %arg6: memref<128x128xf32, #tpu.memory_space<vmem>>, %arg7: memref<128x128xf32, #tpu.memory_space<vmem>>, %arg8: memref<8x128xf32, #tpu.memory_space<vmem>>, %arg9: memref<8x128xf32, #tpu.memory_space<vmem>>, %arg10: memref<8x128xf32, #tpu.memory_space<vmem>>) attributes {dimension_semantics = [#tpu.dimension_semantics<parallel>, #tpu.dimension_semantics<parallel>, #tpu.dimension_semantics<arbitrary>], iteration_bounds = array<i64: 1, 1, 1>, scalar_prefetch = 0 : i64, scratch_operands = 2 : i64, tpu.core_type = #tpu.core_type<tc>, window_params = [{transform_indices = @transform_0, window_bounds = array<i64: 8, 128>}, {transform_indices = @transform_1, window_bounds = array<i64: 128, 128>}, {transform_indices = @transform_2, window_bounds = array<i64: 1, 128>}, {transform_indices = @transform_3, window_bounds = array<i64: 128, 128>}, {transform_indices = @transform_4, window_bounds = array<i64: 128, 128>}, {transform_indices = @transform_5, window_bounds = array<i64: 8, 128>}]} {
    %c0_i32 = arith.constant 0 : i32
    %0 = arith.cmpi eq, %arg2, %c0_i32 : i32
    %1 = arith.extui %0 : i1 to i32
    %c0_i32_0 = arith.constant 0 : i32
    %2 = arith.cmpi ne, %1, %c0_i32_0 : i32
    scf.if %2 {
      %cst_17 = arith.constant 0.000000e+00 : f32
      %17 = vector.broadcast %cst_17 : f32 to vector<8x128xf32>
      %c0_18 = arith.constant 0 : index
      %c0_19 = arith.constant 0 : index
      %18 = vector.load %arg9[%c0_18, %c0_19] : memref<8x128xf32, #tpu.memory_space<vmem>>, vector<8x128xf32>
      tpu.vector_store %arg9[%c0_18, %c0_19], %17 {strides = array<i32>} : memref<8x128xf32, #tpu.memory_space<vmem>>, vector<8x128xf32>,
      %cst_20 = arith.constant 0.000000e+00 : f32
      %19 = vector.broadcast %cst_20 : f32 to vector<8x128xf32>
      %c0_21 = arith.constant 0 : index
      %c0_22 = arith.constant 0 : index
      %20 = vector.load %arg10[%c0_21, %c0_22] : memref<8x128xf32, #tpu.memory_space<vmem>>, vector<8x128xf32>
      tpu.vector_store %arg10[%c0_21, %c0_22], %19 {strides = array<i32>} : memref<8x128xf32, #tpu.memory_space<vmem>>, vector<8x128xf32>,
    } else {
    }
    %c0 = arith.constant 0 : index
    %c0_1 = arith.constant 0 : index
    %3 = vector.load %arg3[%c0, %c0_1] : memref<8x128xf32, #tpu.memory_space<vmem>>, vector<8x128xf32>
    %c0_2 = arith.constant 0 : index
    %c0_3 = arith.constant 0 : index
    %4 = vector.load %arg9[%c0_2, %c0_3] : memref<8x128xf32, #tpu.memory_space<vmem>>, vector<8x128xf32>
    %c0_4 = arith.constant 0 : index
    %c0_5 = arith.constant 0 : index
    %5 = vector.load %arg4[%c0_4, %c0_5] : memref<128x128xf32, #tpu.memory_space<vmem>>, vector<128x128xf32>
    %cst = arith.constant dense<0.000000e+00> : vector<8x128xf32>
    %6 = tpu.matmul %3, %5, %cst {dimension_numbers = #tpu.dot_dimension_numbers<[1], [1], [0], [0], [0, 0, 1, 0], [], []>} : vector<8x128xf32>, vector<128x128xf32>, vector<8x128xf32> -> vector<8x128xf32>
    %7 = arith.addf %4, %6 : vector<8x128xf32>
    %c0_6 = arith.constant 0 : index
    %c0_7 = arith.constant 0 : index
    %8 = vector.load %arg9[%c0_6, %c0_7] : memref<8x128xf32, #tpu.memory_space<vmem>>, vector<8x128xf32>
    tpu.vector_store %arg9[%c0_6, %c0_7], %7 {strides = array<i32>} : memref<8x128xf32, #tpu.memory_space<vmem>>, vector<8x128xf32>,
    %c0_8 = arith.constant 0 : index
    %c0_9 = arith.constant 0 : index
    %9 = vector.load %arg10[%c0_8, %c0_9] : memref<8x128xf32, #tpu.memory_space<vmem>>, vector<8x128xf32>
    %c0_10 = arith.constant 0 : index
    %c0_11 = arith.constant 0 : index
    %10 = vector.load %arg6[%c0_10, %c0_11] : memref<128x128xf32, #tpu.memory_space<vmem>>, vector<128x128xf32>
    %cst_12 = arith.constant dense<0.000000e+00> : vector<8x128xf32>
    %11 = tpu.matmul %3, %10, %cst_12 {dimension_numbers = #tpu.dot_dimension_numbers<[1], [0], [0], [1], [0, 0, 1, 1], [], []>} : vector<8x128xf32>, vector<128x128xf32>, vector<8x128xf32> -> vector<8x128xf32>
    %12 = arith.addf %9, %11 : vector<8x128xf32>
    %c0_13 = arith.constant 0 : index
    %c0_14 = arith.constant 0 : index
    %13 = vector.load %arg10[%c0_13, %c0_14] : memref<8x128xf32, #tpu.memory_space<vmem>>, vector<8x128xf32>
    tpu.vector_store %arg10[%c0_13, %c0_14], %12 {strides = array<i32>} : memref<8x128xf32, #tpu.memory_space<vmem>>, vector<8x128xf32>,
    %c0_i32_15 = arith.constant 0 : i32
    %14 = arith.cmpi eq, %arg2, %c0_i32_15 : i32
    %15 = arith.extui %14 : i1 to i32
    %c0_i32_16 = arith.constant 0 : i32
    %16 = arith.cmpi ne, %15, %c0_i32_16 : i32
    scf.if %16 {
      %c0_17 = arith.constant 0 : index
      %c0_18 = arith.constant 0 : index
      %17 = vector.load %arg10[%c0_17, %c0_18] : memref<8x128xf32, #tpu.memory_space<vmem>>, vector<8x128xf32>
      %cst_19 = arith.constant 2.000000e+00 : f32
      %18 = vector.broadcast %cst_19 : f32 to vector<8x128xf32>
      %19 = arith.mulf %18, %17 : vector<8x128xf32>
      %c0_20 = arith.constant 0 : index
      %c0_21 = arith.constant 0 : index
      %20 = vector.load %arg7[%c0_20, %c0_21] : memref<128x128xf32, #tpu.memory_space<vmem>>, vector<128x128xf32>
      %cst_22 = arith.constant dense<0.000000e+00> : vector<8x128xf32>
      %21 = tpu.matmul %19, %20, %cst_22 {dimension_numbers = #tpu.dot_dimension_numbers<[1], [0], [0], [1], [0, 0, 1, 1], [], []>} : vector<8x128xf32>, vector<128x128xf32>, vector<8x128xf32> -> vector<8x128xf32>
      %c0_23 = arith.constant 0 : index
      %c0_24 = arith.constant 0 : index
      %22 = vector.load %arg9[%c0_23, %c0_24] : memref<8x128xf32, #tpu.memory_space<vmem>>, vector<8x128xf32>
      %c0_25 = arith.constant 0 : index
      %c0_26 = arith.constant 0 : index
      %23 = vector.load %arg5[%c0_25, %c0_26] : memref<1x128xf32, #tpu.memory_space<vmem>>, vector<1x128xf32>
      %24 = vector.broadcast %23 : vector<1x128xf32> to vector<8x128xf32>
      %25 = arith.addf %22, %24 : vector<8x128xf32>
      %26 = arith.addf %25, %21 : vector<8x128xf32>
      %c0_27 = arith.constant 0 : index
      %c0_28 = arith.constant 0 : index
      %27 = vector.load %arg8[%c0_27, %c0_28] : memref<8x128xf32, #tpu.memory_space<vmem>>, vector<8x128xf32>
      tpu.vector_store %arg8[%c0_27, %c0_28], %26 {strides = array<i32>} : memref<8x128xf32, #tpu.memory_space<vmem>>, vector<8x128xf32>,
    } else {
    }
    return
  }
  func.func @transform_0(%arg0: i32, %arg1: i32, %arg2: i32) -> (i32, i32) {
    %c0_i32 = arith.constant 0 : i32
    return %arg0, %arg2 : i32, i32
  }
  func.func @transform_1(%arg0: i32, %arg1: i32, %arg2: i32) -> (i32, i32) {
    %c0_i32 = arith.constant 0 : i32
    return %arg1, %arg2 : i32, i32
  }
  func.func @transform_2(%arg0: i32, %arg1: i32, %arg2: i32) -> (i32, i32) {
    %c0_i32 = arith.constant 0 : i32
    %c0_i32_0 = arith.constant 0 : i32
    return %c0_i32, %arg1 : i32, i32
  }
  func.func @transform_3(%arg0: i32, %arg1: i32, %arg2: i32) -> (i32, i32) {
    %c0_i32 = arith.constant 0 : i32
    %c0_i32_0 = arith.constant 0 : i32
    return %arg2, %c0_i32 : i32, i32
  }
  func.func @transform_4(%arg0: i32, %arg1: i32, %arg2: i32) -> (i32, i32) {
    %c0_i32 = arith.constant 0 : i32
    %c0_i32_0 = arith.constant 0 : i32
    return %c0_i32, %arg1 : i32, i32
  }
  func.func @transform_5(%arg0: i32, %arg1: i32, %arg2: i32) -> (i32, i32) {
    %c0_i32 = arith.constant 0 : i32
    return %arg0, %arg1 : i32, i32
  }
}

</mosaic_0001>

<llo_original>
// kernel: tpu_custom_call.1
$region0: #{tpu_custom_call.1}
  #allocation0 [shape = 'u32[]', space=smem, size = 0x4, offset = 0x4, fixed_abs, tag = 'smem constant byte address 0x4 - core index']
  #allocation1 [shape = 'u32[144,128]{1,0:T(1,128)}', space=vmem, size = 0x12000, scoped, tag = 'internal scratch']
  #allocation2 [shape = 'f32[8,128]{1,0:T(8,128)}', space=vmem, size = 0x1000, scoped, tag = 'scratch operand']
  #allocation3 [shape = 'f32[8,128]{1,0:T(8,128)}', space=vmem, size = 0x1000, scoped, tag = 'scratch operand']
  %s0 = inlined_call_operand.hbm [shape: f32[8,128], index: 0, kind: input, shape index: {}]
  %s1 = inlined_call_operand.hbm [shape: f32[128,128], index: 1, kind: input, shape index: {}]
  %s2 = inlined_call_operand.vmem [shape: f32[1,128], index: 2, kind: input, shape index: {}]
  %s3 = inlined_call_operand.hbm [shape: f32[128,128], index: 3, kind: input, shape index: {}]
  %s4 = inlined_call_operand.hbm [shape: f32[128,128], index: 4, kind: input, shape index: {}]
  %s5 = inlined_call_operand.hbm [shape: f32[8,128], index: 5, kind: output, shape index: {}]
  %s6 = sld [smem:[#allocation0]]
  $region54: #{tpu_custom_call.1} parent=0
    _
  %s8 = ssub.s32 1, %s6
  %s9 = scalar_select 0, %s8, %s6
  $region1: #{tpu_custom_call.1} parent=0
    #allocation4 [shape = 'u8[4096]{0}', space=vmem, size = 0x1000, scoped, tag = 'input window, operand 0, single buffered']
    #allocation5 [shape = 's32[1]{0}', space=sflag, size = 0x4, scoped, tag = 'scoped memory for tpu_custom_call.1']
    #allocation6 [shape = 's32[1]{0}', space=sflag, size = 0x4, scoped, tag = 'scoped memory for tpu_custom_call.1']
    #allocation7 [shape = 'u8[65536]{0}', space=vmem, size = 0x10000, scoped, tag = 'input window, operand 1, single buffered']
    #allocation8 [shape = 's32[1]{0}', space=sflag, size = 0x4, scoped, tag = 'scoped memory for tpu_custom_call.1']
    #allocation9 [shape = 'u8[65536]{0}', space=vmem, size = 0x10000, scoped, tag = 'input window, operand 3, single buffered']
    #allocation10 [shape = 'u8[65536]{0}', space=vmem, size = 0x10000, scoped, tag = 'input window, operand 4, single buffered']
    #allocation11 [shape = 's32[1]{0}', space=sflag, size = 0x4, scoped, tag = 'scoped memory for tpu_custom_call.1']
    #allocation12 [shape = 'u8[4096]{0}', space=vmem, size = 0x1000, scoped, tag = 'output window, operand 0, single buffered']
    %10 = vsyncpa [#allocation5], 0
    %11 = vsyncpa [#allocation8], 0
    %12 = vsyncpa [#allocation11], 0
    %13 = vsyncpa [#allocation6], 0
    // Predicated region
    $region2: #{tpu_custom_call.1} parent=1 // pred_check
      _
    $region3: #{tpu_custom_call.1} parent=1 // pred_check_branch
      %15 = sbr.rel (0) target = $region5
    $region4: #{tpu_custom_call.1} parent=1 // pred_region
      %s17 = ssub.s32 128, 128
      %18 = vsyncadd [#allocation5], %s17
      %s20 = sshll.u32 [#allocation4], 4
      %s21 = int_to_ptr.vmem [resolvable:$true] %s20
      %23 = dma.hbm_to_vmem [thread:$0]  %s0, 128, %s21, [#allocation5]
    $region5: #{tpu_custom_call.1} parent=1 // pred_fallthru
      _
    // Predicated region
    $region6: #{tpu_custom_call.1} parent=1 // pred_check
      _
    $region7: #{tpu_custom_call.1} parent=1 // pred_check_branch
      %25 = sbr.rel (0) target = $region9
    $region8: #{tpu_custom_call.1} parent=1 // pred_region
      %s27 = ssub.s32 2048, 2048
      %28 = vsyncadd [#allocation8], %s27
      %s29 = sshll.u32 [#allocation7], 4
      %s30 = int_to_ptr.vmem [resolvable:$true] %s29
      %35 = dma.hbm_to_vmem [thread:$0]  %s1, 2048, %s30, [#allocation8], 128, 128, 8
    $region9: #{tpu_custom_call.1} parent=1 // pred_fallthru
      _
    // Predicated region
    $region10: #{tpu_custom_call.1} parent=1 // pred_check
      _
    $region11: #{tpu_custom_call.1} parent=1 // pred_check_branch
      %37 = sbr.rel (0) target = $region13
    $region12: #{tpu_custom_call.1} parent=1 // pred_region
      _
    $region13: #{tpu_custom_call.1} parent=1 // pred_fallthru
      _
    // Predicated region
    $region14: #{tpu_custom_call.1} parent=1 // pred_check
      _
    $region15: #{tpu_custom_call.1} parent=1 // pred_check_branch
      %39 = sbr.rel (0) target = $region17
    $region16: #{tpu_custom_call.1} parent=1 // pred_region
      %s41 = ssub.s32 2048, 2048
      %42 = vsyncadd [#allocation8], %s41
      %s43 = sshll.u32 [#allocation9], 4
      %s44 = int_to_ptr.vmem [resolvable:$true] %s43
      %49 = dma.hbm_to_vmem [thread:$0]  %s3, 2048, %s44, [#allocation8], 128, 128, 8
    $region17: #{tpu_custom_call.1} parent=1 // pred_fallthru
      _
    // Predicated region
    $region18: #{tpu_custom_call.1} parent=1 // pred_check
      _
    $region19: #{tpu_custom_call.1} parent=1 // pred_check_branch
      %51 = sbr.rel (0) target = $region21
    $region20: #{tpu_custom_call.1} parent=1 // pred_region
      %s53 = ssub.s32 2048, 2048
      %54 = vsyncadd [#allocation11], %s53
      %s55 = sshll.u32 [#allocation10], 4
      %s56 = int_to_ptr.vmem [resolvable:$true] %s55
      %61 = dma.hbm_to_vmem [thread:$0]  %s4, 2048, %s56, [#allocation11], 128, 128, 8
    $region21: #{tpu_custom_call.1} parent=1 // pred_fallthru
      _
    // Predicated region
    $region22: #{tpu_custom_call.1} parent=1 // pred_check
      _
    $region23: #{tpu_custom_call.1} parent=1 // pred_check_branch
      %63 = sbr.rel (0) target = $region25
    $region24: #{tpu_custom_call.1} parent=1 // pred_region
      %64 = dma.done [#allocation5], 128
    $region25: #{tpu_custom_call.1} parent=1 // pred_fallthru
      _
    // Predicated region
    $region26: #{tpu_custom_call.1} parent=1 // pred_check
      _
    $region27: #{tpu_custom_call.1} parent=1 // pred_check_branch
      %66 = sbr.rel (0) target = $region29
    $region28: #{tpu_custom_call.1} parent=1 // pred_region
      %67 = dma.done [#allocation8], 2048
    $region29: #{tpu_custom_call.1} parent=1 // pred_fallthru
      _
    // Predicated region
    $region30: #{tpu_custom_call.1} parent=1 // pred_check
      _
    $region31: #{tpu_custom_call.1} parent=1 // pred_check_branch
      %69 = sbr.rel (0) target = $region33
    $region32: #{tpu_custom_call.1} parent=1 // pred_region
      %70 = dma.done [#allocation8], 2048
    $region33: #{tpu_custom_call.1} parent=1 // pred_fallthru
      _
    // Predicated region
    $region34: #{tpu_custom_call.1} parent=1 // pred_check
      _
    $region35: #{tpu_custom_call.1} parent=1 // pred_check_branch
      %72 = sbr.rel (0) target = $region37
    $region36: #{tpu_custom_call.1} parent=1 // pred_region
      %73 = dma.done [#allocation11], 2048
    $region37: #{tpu_custom_call.1} parent=1 // pred_fallthru
      _
    %p74 = scmp.eq.s32.totalorder 0, 0
    // Predicated region
    $region38: #{tpu_custom_call.1} parent=1 // pred_check
      %p75 = pneg %p74
    $region39: #{tpu_custom_call.1} parent=1 // pred_check_branch
      %77 = sbr.rel (%p75) target = $region41
    $region40: #{tpu_custom_call.1} parent=1 // pred_region
      %78 = vst [vmem:[#allocation2] sm:$0xff] 0.0
      %79 = vst [vmem:[#allocation3] sm:$0xff] 0.0
    $region41: #{tpu_custom_call.1} parent=1 // pred_fallthru
      _
    %v80 = vld [vmem:[#allocation4] sm:$0xff]
    %v81 = vld [vmem:[#allocation2] sm:$0xff]
    %v82 = vld [vmem:[#allocation7] sm:$0xff]
    %v83 = vld [vmem:[#allocation7 + $0x8] sm:$0xff]
    %v84 = vld [vmem:[#allocation7 + $0x10] sm:$0xff]
    %v85 = vld [vmem:[#allocation7 + $0x18] sm:$0xff]
    %v86 = vld [vmem:[#allocation7 + $0x20] sm:$0xff]
    %v87 = vld [vmem:[#allocation7 + $0x28] sm:$0xff]
    %v88 = vld [vmem:[#allocation7 + $0x30] sm:$0xff]
    %v89 = vld [vmem:[#allocation7 + $0x38] sm:$0xff]
    %v90 = vld [vmem:[#allocation7 + $0x40] sm:$0xff]
    %v91 = vld [vmem:[#allocation7 + $0x48] sm:$0xff]
    %v92 = vld [vmem:[#allocation7 + $0x50] sm:$0xff]
    %v93 = vld [vmem:[#allocation7 + $0x58] sm:$0xff]
    %v94 = vld [vmem:[#allocation7 + $0x60] sm:$0xff]
    %v95 = vld [vmem:[#allocation7 + $0x68] sm:$0xff]
    %v96 = vld [vmem:[#allocation7 + $0x70] sm:$0xff]
    %v97 = vld [vmem:[#allocation7 + $0x78] sm:$0xff]
    %98 = vmatprep.subr.mxu0 0.0
    %99 = vmatpush1.xpose.msra.mxu0 %v97
    %100 = vmatprep.subr.mxu0 0.0
    %101 = vmatpush1.xpose.msra.mxu0 %v96
    %102 = vmatprep.subr.mxu0 0.0
    %103 = vmatpush1.xpose.msra.mxu0 %v95
    %104 = vmatprep.subr.mxu0 0.0
    %105 = vmatpush1.xpose.msra.mxu0 %v94
    %106 = vmatprep.subr.mxu0 0.0
    %107 = vmatpush1.xpose.msra.mxu0 %v93
    %108 = vmatprep.subr.mxu0 0.0
    %109 = vmatpush1.xpose.msra.mxu0 %v92
    %110 = vmatprep.subr.mxu0 0.0
    %111 = vmatpush1.xpose.msra.mxu0 %v91
    %112 = vmatprep.subr.mxu0 0.0
    %113 = vmatpush1.xpose.msra.mxu0 %v90
    %114 = vmatprep.subr.mxu0 0.0
    %115 = vmatpush1.xpose.msra.mxu0 %v89
    %116 = vmatprep.subr.mxu0 0.0
    %117 = vmatpush1.xpose.msra.mxu0 %v88
    %118 = vmatprep.subr.mxu0 0.0
    %119 = vmatpush1.xpose.msra.mxu0 %v87
    %120 = vmatprep.subr.mxu0 0.0
    %121 = vmatpush1.xpose.msra.mxu0 %v86
    %122 = vmatprep.subr.mxu0 0.0
    %123 = vmatpush1.xpose.msra.mxu0 %v85
    %124 = vmatprep.subr.mxu0 0.0
    %125 = vmatpush1.xpose.msra.mxu0 %v84
    %126 = vmatprep.subr.mxu0 0.0
    %127 = vmatpush1.xpose.msra.mxu0 %v83
    %128 = vmatprep.subr.mxu0 0.0
    %129 = vmatpush1.xpose.msra.mxu0 %v82
    %130 = vmatprep.subr.mxu0 0.0
    %131 = vmatpush2.xpose.msra.mxu0 0.0
    %132 = vmatprep.subr.mxu0 0.0
    %133 = vmatpush2.xpose.msra.mxu0 0.0
    %134 = vmatprep.subr.mxu0 0.0
    %135 = vmatpush2.xpose.msra.mxu0 0.0
    %136 = vmatprep.subr.mxu0 0.0
    %137 = vmatpush2.xpose.msra.mxu0 0.0
    %138 = vmatprep.subr.mxu0 0.0
    %139 = vmatpush2.xpose.msra.mxu0 0.0
    %140 = vmatprep.subr.mxu0 0.0
    %141 = vmatpush2.xpose.msra.mxu0 0.0
    %142 = vmatprep.subr.mxu0 0.0
    %143 = vmatpush2.xpose.msra.mxu0 0.0
    %144 = vmatprep.subr.mxu0 0.0
    %145 = vmatpush2.xpose.msra.mxu0 0.0
    %146 = vmatprep.subr.mxu0 0.0
    %147 = vmatpush2.xpose.msra.mxu0 0.0
    %148 = vmatprep.subr.mxu0 0.0
    %149 = vmatpush2.xpose.msra.mxu0 0.0
    %150 = vmatprep.subr.mxu0 0.0
    %151 = vmatpush2.xpose.msra.mxu0 0.0
    %152 = vmatprep.subr.mxu0 0.0
    %153 = vmatpush2.xpose.msra.mxu0 0.0
    %154 = vmatprep.subr.mxu0 0.0
    %155 = vmatpush2.xpose.msra.mxu0 0.0
    %156 = vmatprep.subr.mxu0 0.0
    %157 = vmatpush2.xpose.msra.mxu0 0.0
    %158 = vmatprep.subr.mxu0 0.0
    %159 = vmatpush2.xpose.msra.mxu0 0.0
    %160 = vmatprep.subr.mxu0 0.0
    %161 = vmatpush2.xpose.msra.mxu0 0.0
    %162 = vmatprep.mubr.f32.mxu0 0.0
    %163 = vmatmul.mubr.f32.gmra.mxu0 %v80
    %v164 = vpop.f32.mrf.mxu0
    %v165 = vadd.f32 0.0, %v164
    %v166 = vpop.f32.mrf.mxu0
    %167 = vdwg.mxu0
    %v168 = vadd.f32 %v81, %v165
    %169 = vst [vmem:[#allocation2] sm:$0xff] %v168
    %v170 = vld [vmem:[#allocation3] sm:$0xff]
    %v171 = vld [vmem:[#allocation9] sm:$0xff]
    %v172 = vld [vmem:[#allocation9 + $0x8] sm:$0xff]
    %v173 = vld [vmem:[#allocation9 + $0x10] sm:$0xff]
    %v174 = vld [vmem:[#allocation9 + $0x18] sm:$0xff]
    %v175 = vld [vmem:[#allocation9 + $0x20] sm:$0xff]
    %v176 = vld [vmem:[#allocation9 + $0x28] sm:$0xff]
    %v177 = vld [vmem:[#allocation9 + $0x30] sm:$0xff]
    %v178 = vld [vmem:[#allocation9 + $0x38] sm:$0xff]
    %v179 = vld [vmem:[#allocation9 + $0x40] sm:$0xff]
    %v180 = vld [vmem:[#allocation9 + $0x48] sm:$0xff]
    %v181 = vld [vmem:[#allocation9 + $0x50] sm:$0xff]
    %v182 = vld [vmem:[#allocation9 + $0x58] sm:$0xff]
    %v183 = vld [vmem:[#allocation9 + $0x60] sm:$0xff]
    %v184 = vld [vmem:[#allocation9 + $0x68] sm:$0xff]
    %v185 = vld [vmem:[#allocation9 + $0x70] sm:$0xff]
    %v186 = vld [vmem:[#allocation9 + $0x78] sm:$0xff]
    %187 = vmatprep.subr.mxu0 0.0
    %188 = vmatpush1.msra.mxu0 %v186
    %189 = vmatprep.subr.mxu0 0.0
    %190 = vmatpush1.msra.mxu0 %v185
    %191 = vmatprep.subr.mxu0 0.0
    %192 = vmatpush1.msra.mxu0 %v184
    %193 = vmatprep.subr.mxu0 0.0
    %194 = vmatpush1.msra.mxu0 %v183
    %195 = vmatprep.subr.mxu0 0.0
    %196 = vmatpush1.msra.mxu0 %v182
    %197 = vmatprep.subr.mxu0 0.0
    %198 = vmatpush1.msra.mxu0 %v181
    %199 = vmatprep.subr.mxu0 0.0
    %200 = vmatpush1.msra.mxu0 %v180
    %201 = vmatprep.subr.mxu0 0.0
    %202 = vmatpush1.msra.mxu0 %v179
    %203 = vmatprep.subr.mxu0 0.0
    %204 = vmatpush1.msra.mxu0 %v178
    %205 = vmatprep.subr.mxu0 0.0
    %206 = vmatpush1.msra.mxu0 %v177
    %207 = vmatprep.subr.mxu0 0.0
    %208 = vmatpush1.msra.mxu0 %v176
    %209 = vmatprep.subr.mxu0 0.0
    %210 = vmatpush1.msra.mxu0 %v175
    %211 = vmatprep.subr.mxu0 0.0
    %212 = vmatpush1.msra.mxu0 %v174
    %213 = vmatprep.subr.mxu0 0.0
    %214 = vmatpush1.msra.mxu0 %v173
    %215 = vmatprep.subr.mxu0 0.0
    %216 = vmatpush1.msra.mxu0 %v172
    %217 = vmatprep.subr.mxu0 0.0
    %218 = vmatpush1.msra.mxu0 %v171
    %219 = vmatprep.subr.mxu0 0.0
    %220 = vmatpush2.msra.mxu0 0.0
    %221 = vmatprep.subr.mxu0 0.0
    %222 = vmatpush2.msra.mxu0 0.0
    %223 = vmatprep.subr.mxu0 0.0
    %224 = vmatpush2.msra.mxu0 0.0
    %225 = vmatprep.subr.mxu0 0.0
    %226 = vmatpush2.msra.mxu0 0.0
    %227 = vmatprep.subr.mxu0 0.0
    %228 = vmatpush2.msra.mxu0 0.0
    %229 = vmatprep.subr.mxu0 0.0
    %230 = vmatpush2.msra.mxu0 0.0
    %231 = vmatprep.subr.mxu0 0.0
    %232 = vmatpush2.msra.mxu0 0.0
    %233 = vmatprep.subr.mxu0 0.0
    %234 = vmatpush2.msra.mxu0 0.0
    %235 = vmatprep.subr.mxu0 0.0
    %236 = vmatpush2.msra.mxu0 0.0
    %237 = vmatprep.subr.mxu0 0.0
    %238 = vmatpush2.msra.mxu0 0.0
    %239 = vmatprep.subr.mxu0 0.0
    %240 = vmatpush2.msra.mxu0 0.0
    %241 = vmatprep.subr.mxu0 0.0
    %242 = vmatpush2.msra.mxu0 0.0
    %243 = vmatprep.subr.mxu0 0.0
    %244 = vmatpush2.msra.mxu0 0.0
    %245 = vmatprep.subr.mxu0 0.0
    %246 = vmatpush2.msra.mxu0 0.0
    %247 = vmatprep.subr.mxu0 0.0
    %248 = vmatpush2.msra.mxu0 0.0
    %249 = vmatprep.subr.mxu0 0.0
    %250 = vmatpush2.msra.mxu0 0.0
    %251 = vmatprep.mubr.f32.mxu0 0.0
    %252 = vmatmul.mubr.f32.gmra.mxu0 %v80
    %v253 = vpop.f32.mrf.mxu0
    %v254 = vadd.f32 0.0, %v253
    %v255 = vpop.f32.mrf.mxu0
    %256 = vdwg.mxu0
    %v257 = vadd.f32 %v170, %v254
    %258 = vst [vmem:[#allocation3] sm:$0xff] %v257
    // Predicated region
    $region42: #{tpu_custom_call.1} parent=1 // pred_check
      %p259 = pneg %p74
    $region43: #{tpu_custom_call.1} parent=1 // pred_check_branch
      %261 = sbr.rel (%p259) target = $region45
    $region44: #{tpu_custom_call.1} parent=1 // pred_region
      %v262 = vld [vmem:[#allocation3] sm:$0xff]
      %v263 = vmul.f32 %v262, 2.0
      %v264 = vld [vmem:[#allocation10] sm:$0xff]
      %v265 = vld [vmem:[#allocation10 + $0x8] sm:$0xff]
      %v266 = vld [vmem:[#allocation10 + $0x10] sm:$0xff]
      %v267 = vld [vmem:[#allocation10 + $0x18] sm:$0xff]
      %v268 = vld [vmem:[#allocation10 + $0x20] sm:$0xff]
      %v269 = vld [vmem:[#allocation10 + $0x28] sm:$0xff]
      %v270 = vld [vmem:[#allocation10 + $0x30] sm:$0xff]
      %v271 = vld [vmem:[#allocation10 + $0x38] sm:$0xff]
      %v272 = vld [vmem:[#allocation10 + $0x40] sm:$0xff]
      %v273 = vld [vmem:[#allocation10 + $0x48] sm:$0xff]
      %v274 = vld [vmem:[#allocation10 + $0x50] sm:$0xff]
      %v275 = vld [vmem:[#allocation10 + $0x58] sm:$0xff]
      %v276 = vld [vmem:[#allocation10 + $0x60] sm:$0xff]
      %v277 = vld [vmem:[#allocation10 + $0x68] sm:$0xff]
      %v278 = vld [vmem:[#allocation10 + $0x70] sm:$0xff]
      %v279 = vld [vmem:[#allocation10 + $0x78] sm:$0xff]
      %280 = vmatprep.subr.mxu0 0.0
      %281 = vmatpush1.msra.mxu0 %v279
      %282 = vmatprep.subr.mxu0 0.0
      %283 = vmatpush1.msra.mxu0 %v278
      %284 = vmatprep.subr.mxu0 0.0
      %285 = vmatpush1.msra.mxu0 %v277
      %286 = vmatprep.subr.mxu0 0.0
      %287 = vmatpush1.msra.mxu0 %v276
      %288 = vmatprep.subr.mxu0 0.0
      %289 = vmatpush1.msra.mxu0 %v275
      %290 = vmatprep.subr.mxu0 0.0
      %291 = vmatpush1.msra.mxu0 %v274
      %292 = vmatprep.subr.mxu0 0.0
      %293 = vmatpush1.msra.mxu0 %v273
      %294 = vmatprep.subr.mxu0 0.0
      %295 = vmatpush1.msra.mxu0 %v272
      %296 = vmatprep.subr.mxu0 0.0
      %297 = vmatpush1.msra.mxu0 %v271
      %298 = vmatprep.subr.mxu0 0.0
      %299 = vmatpush1.msra.mxu0 %v270
      %300 = vmatprep.subr.mxu0 0.0
      %301 = vmatpush1.msra.mxu0 %v269
      %302 = vmatprep.subr.mxu0 0.0
      %303 = vmatpush1.msra.mxu0 %v268
      %304 = vmatprep.subr.mxu0 0.0
      %305 = vmatpush1.msra.mxu0 %v267
      %306 = vmatprep.subr.mxu0 0.0
      %307 = vmatpush1.msra.mxu0 %v266
      %308 = vmatprep.subr.mxu0 0.0
      %309 = vmatpush1.msra.mxu0 %v265
      %310 = vmatprep.subr.mxu0 0.0
      %311 = vmatpush1.msra.mxu0 %v264
      %312 = vmatprep.subr.mxu0 0.0
      %313 = vmatpush2.msra.mxu0 0.0
      %314 = vmatprep.subr.mxu0 0.0
      %315 = vmatpush2.msra.mxu0 0.0
      %316 = vmatprep.subr.mxu0 0.0
      %317 = vmatpush2.msra.mxu0 0.0
      %318 = vmatprep.subr.mxu0 0.0
      %319 = vmatpush2.msra.mxu0 0.0
      %320 = vmatprep.subr.mxu0 0.0
      %321 = vmatpush2.msra.mxu0 0.0
      %322 = vmatprep.subr.mxu0 0.0
      %323 = vmatpush2.msra.mxu0 0.0
      %324 = vmatprep.subr.mxu0 0.0
      %325 = vmatpush2.msra.mxu0 0.0
      %326 = vmatprep.subr.mxu0 0.0
      %327 = vmatpush2.msra.mxu0 0.0
      %328 = vmatprep.subr.mxu0 0.0
      %329 = vmatpush2.msra.mxu0 0.0
      %330 = vmatprep.subr.mxu0 0.0
      %331 = vmatpush2.msra.mxu0 0.0
      %332 = vmatprep.subr.mxu0 0.0
      %333 = vmatpush2.msra.mxu0 0.0
      %334 = vmatprep.subr.mxu0 0.0
      %335 = vmatpush2.msra.mxu0 0.0
      %336 = vmatprep.subr.mxu0 0.0
      %337 = vmatpush2.msra.mxu0 0.0
      %338 = vmatprep.subr.mxu0 0.0
      %339 = vmatpush2.msra.mxu0 0.0
      %340 = vmatprep.subr.mxu0 0.0
      %341 = vmatpush2.msra.mxu0 0.0
      %342 = vmatprep.subr.mxu0 0.0
      %343 = vmatpush2.msra.mxu0 0.0
      %344 = vmatprep.mubr.f32.mxu0 0.0
      %345 = vmatmul.mubr.f32.gmra.mxu0 %v263
      %v346 = vpop.f32.mrf.mxu0
      %v347 = vadd.f32 0.0, %v346
      %v348 = vpop.f32.mrf.mxu0
      %349 = vdwg.mxu0
      %v350 = vld [vmem:[#allocation2] sm:$0xff]
      %v351 = vld [vmem:[%s2] sm:$0x1]
      %v353 = vlaneseq
      %v354 = vshrl.u32 %v353, 7
      %v355 = vsub.s32 0, %v354
      %v356 = vrot.slane %v351, %v355
      %v358 = vadd.f32 %v350, %v356
      %v359 = vadd.f32 %v358, %v347
      %360 = vst [vmem:[#allocation12] sm:$0xff] %v359
    $region45: #{tpu_custom_call.1} parent=1 // pred_fallthru
      _
    // Predicated region
    $region46: #{tpu_custom_call.1} parent=1 // pred_check
      _
    $region47: #{tpu_custom_call.1} parent=1 // pred_check_branch
      %362 = sbr.rel (0) target = $region49
    $region48: #{tpu_custom_call.1} parent=1 // pred_region
      %s364 = ssub.s32 128, 128
      %365 = vsyncadd [#allocation6], %s364
      %s367 = sshll.u32 [#allocation12], 4
      %s368 = int_to_ptr.vmem [resolvable:$true] %s367
      %370 = dma.vmem_to_hbm [thread:$0]  %s368, 128, %s5, [#allocation6]
    $region49: #{tpu_custom_call.1} parent=1 // pred_fallthru
      _
    // Predicated region
    $region50: #{tpu_custom_call.1} parent=1 // pred_check
      _
    $region51: #{tpu_custom_call.1} parent=1 // pred_check_branch
      %372 = sbr.rel (0) target = $region53
    $region52: #{tpu_custom_call.1} parent=1 // pred_region
      %373 = dma.done [#allocation6], 128
    $region53: #{tpu_custom_call.1} parent=1 // pred_fallthru
      _
    %374 = vsyncpa [#allocation5], 1
    %375 = vsyncpa [#allocation8], 1
    %376 = vsyncpa [#allocation11], 1
    %377 = vsyncpa [#allocation6], 1

</llo_original>
